<compile_context>
chip_gen: v7x
topology: tpu7x:2x2x1
jax: 0.10.0
libtpu: 0.0.40
codegen_flags: <defaults>
</compile_context>

<pallas_src>
import numpy as np
import jax
import jax.numpy as jnp
from jax import lax
from jax.experimental import pallas as pl
from jax.experimental.pallas import tpu as pltpu

_VMEM = pltpu.MemorySpace.VMEM


# ----------------------------------------------------------------------------
# Fused ChannelGate kernel
# ----------------------------------------------------------------------------
def _channel_gate_kernel(x_ref, w1_ref, b1_ref, w2_ref, b2_ref, o_ref, p_ref):
    """Fused CBAM channel gate.

    x_ref : (N, C, HW) f32  input feature map with spatial dims flattened
    w1_ref: (C, Cr)         first shared Linear (stored as (in, out))
    b1_ref: (1, Cr)
    w2_ref: (Cr, C)         second shared Linear
    b2_ref: (1, C)
    o_ref : (N, C)          sigmoid gate per (batch, channel)
    p_ref : (2N, C) VMEM scratch holding the stacked [avg; max] rows
    """
    x = x_ref[...]                                    # (N, C, HW)
    n = x.shape[0]
    inv_hw = 1.0 / x.shape[-1]

    # AdaptiveAvgPool2d(1) / AdaptiveMaxPool2d(1): reduce over flattened H*W.
    p_ref[0:n, :] = jnp.sum(x, axis=-1) * inv_hw      # avg rows
    p_ref[n:2 * n, :] = jnp.max(x, axis=-1)           # max rows

    # Shared MLP applied ONCE to the stacked (2N, C) matrix.
    p = p_ref[...]                                    # (2N, C)
    h = jnp.dot(p, w1_ref[...], preferred_element_type=jnp.float32) + b1_ref[...]
    h = jnp.maximum(h, 0.0)                           # ReLU
    a = jnp.dot(h, w2_ref[...], preferred_element_type=jnp.float32) + b2_ref[...]

    # channel_attention = MLP(avg) + MLP(max); gate = sigmoid(...)
    o_ref[...] = jax.nn.sigmoid(a[0:n, :] + a[n:2 * n, :])


def channel_gate(x_nchw, params):
    """Pallas ChannelGate.forward: returns the scale, same shape as x (NCHW)."""
    N, C, H, W = x_nchw.shape
    x3 = x_nchw.reshape(N, C, H * W).astype(jnp.float32)   # free reshape, no relayout
    cr = params["w1"].shape[1]

    gate = pl.pallas_call(
        _channel_gate_kernel,
        out_shape=jax.ShapeDtypeStruct((N, C), jnp.float32),
        in_specs=[pl.BlockSpec(memory_space=_VMEM)] * 5,
        out_specs=pl.BlockSpec(memory_space=_VMEM),
        scratch_shapes=[pltpu.VMEM((2 * N, C), jnp.float32)],
    )(x3,
      params["w1"], params["b1"].reshape(1, cr),
      params["w2"], params["b2"].reshape(1, C))

    # .expand_as(x): broadcast view (no materialized copy), like PyTorch.
    return jnp.broadcast_to(gate[:, :, None, None], (N, C, H, W))


# ----------------------------------------------------------------------------
# Pure-JAX reference (for a tolerance check) and parameter init
# ----------------------------------------------------------------------------
def channel_gate_ref(x, params):
    avg = jnp.mean(x, axis=(2, 3))
    mx = jnp.max(x, axis=(2, 3))

    def mlp(p):
        h = jnp.maximum(p @ params["w1"] + params["b1"], 0.0)
        return h @ params["w2"] + params["b2"]

    g = jax.nn.sigmoid(mlp(avg) + mlp(mx))
    return jnp.broadcast_to(g[:, :, None, None], x.shape)


def init_channel_gate(key, in_channels, reduction=16):
    """Matches PyTorch nn.Linear default init; weights stored (in, out)."""
    cr = max(in_channels // reduction, 1)
    k1, k2, k3, k4 = jax.random.split(key, 4)
    bound1 = 1.0 / np.sqrt(in_channels)   # fan_in of first Linear
    bound2 = 1.0 / np.sqrt(cr)            # fan_in of second Linear
    return dict(
        w1=jax.random.uniform(k1, (in_channels, cr), jnp.float32, -bound1, bound1),
        b1=jax.random.uniform(k2, (cr,), jnp.float32, -bound1, bound1),
        w2=jax.random.uniform(k3, (cr, in_channels), jnp.float32, -bound2, bound2),
        b2=jax.random.uniform(k4, (in_channels,), jnp.float32, -bound2, bound2),
    )


# ----------------------------------------------------------------------------
if __name__ == "__main__":
    key = jax.random.PRNGKey(0)
    kx, kp = jax.random.split(key)

    # Small shapes consistent with the module (reduction=16 => C=64, hidden=4).
    N, C, H, W = 2, 64, 16, 16
    x = jax.random.normal(kx, (N, C, H, W), jnp.float32)     # NCHW like PyTorch
    params = init_channel_gate(kp, C, reduction=16)

    fwd = jax.jit(channel_gate)
    y = jax.block_until_ready(fwd(x, params))

    assert y.shape == (N, C, H, W)
    assert bool(jnp.all(jnp.isfinite(y)))

    y_ref = channel_gate_ref(x, params)
    assert bool(jnp.allclose(y, y_ref, atol=2e-3, rtol=2e-3))

    print("KERNEL_OK")
</pallas_src>

<mosaic_0001>
module attributes {stable_mosaic.version = 11 : i64} {
  func.func @_channel_gate_kernel(%arg0: memref<2x64x256xf32, #tpu.memory_space<vmem>>, %arg1: memref<64x4xf32, #tpu.memory_space<vmem>>, %arg2: memref<1x4xf32, #tpu.memory_space<vmem>>, %arg3: memref<4x64xf32, #tpu.memory_space<vmem>>, %arg4: memref<1x64xf32, #tpu.memory_space<vmem>>, %arg5: memref<2x64xf32, #tpu.memory_space<vmem>>, %arg6: memref<4x64xf32, #tpu.memory_space<vmem>>) attributes {dimension_semantics = [], scalar_prefetch = 0 : i64, scratch_operands = 1 : i64, tpu.core_type = #tpu.core_type<tc>} {
    %c0 = arith.constant 0 : index
    %c0_0 = arith.constant 0 : index
    %c0_1 = arith.constant 0 : index
    %0 = vector.load %arg0[%c0, %c0_0, %c0_1] : memref<2x64x256xf32, #tpu.memory_space<vmem>>, vector<2x64x256xf32>
    %cst = arith.constant dense<0.000000e+00> : vector<2x64xf32>
    %1 = vector.multi_reduction <add>, %0, %cst [2] : vector<2x64x256xf32> to vector<2x64xf32>
    %cst_2 = arith.constant 3.906250e-03 : f32
    %2 = vector.broadcast %cst_2 : f32 to vector<2x64xf32>
    %3 = arith.mulf %1, %2 : vector<2x64xf32>
    %c0_3 = arith.constant 0 : index
    %c0_4 = arith.constant 0 : index
    %4 = vector.load %arg6[%c0_3, %c0_4] : memref<4x64xf32, #tpu.memory_space<vmem>>, vector<2x64xf32>
    tpu.vector_store %arg6[%c0_3, %c0_4], %3 {strides = array<i32>} : memref<4x64xf32, #tpu.memory_space<vmem>>, vector<2x64xf32>,
    %cst_5 = arith.constant dense<0xFF800000> : vector<2x64xf32>
    %5 = vector.multi_reduction <maximumf>, %0, %cst_5 [2] : vector<2x64x256xf32> to vector<2x64xf32>
    %c2 = arith.constant 2 : index
    %c0_6 = arith.constant 0 : index
    %6 = vector.load %arg6[%c2, %c0_6] : memref<4x64xf32, #tpu.memory_space<vmem>>, vector<2x64xf32>
    tpu.vector_store %arg6[%c2, %c0_6], %5 {strides = array<i32>} : memref<4x64xf32, #tpu.memory_space<vmem>>, vector<2x64xf32>,
    %c0_7 = arith.constant 0 : index
    %c0_8 = arith.constant 0 : index
    %7 = vector.load %arg6[%c0_7, %c0_8] : memref<4x64xf32, #tpu.memory_space<vmem>>, vector<4x64xf32>
    %c0_9 = arith.constant 0 : index
    %c0_10 = arith.constant 0 : index
    %8 = vector.load %arg1[%c0_9, %c0_10] : memref<64x4xf32, #tpu.memory_space<vmem>>, vector<64x4xf32>
    %cst_11 = arith.constant dense<0.000000e+00> : vector<4x4xf32>
    %9 = tpu.matmul %7, %8, %cst_11 {dimension_numbers = #tpu.dot_dimension_numbers<[1], [0], [0], [1], [0, 0, 1, 1], [], []>} : vector<4x64xf32>, vector<64x4xf32>, vector<4x4xf32> -> vector<4x4xf32>
    %c0_12 = arith.constant 0 : index
    %c0_13 = arith.constant 0 : index
    %10 = vector.load %arg2[%c0_12, %c0_13] : memref<1x4xf32, #tpu.memory_space<vmem>>, vector<1x4xf32>
    %11 = vector.broadcast %10 : vector<1x4xf32> to vector<4x4xf32>
    %12 = arith.addf %9, %11 : vector<4x4xf32>
    %cst_14 = arith.constant 0.000000e+00 : f32
    %13 = vector.broadcast %cst_14 : f32 to vector<4x4xf32>
    %14 = arith.maximumf %12, %13 : vector<4x4xf32>
    %c0_15 = arith.constant 0 : index
    %c0_16 = arith.constant 0 : index
    %15 = vector.load %arg3[%c0_15, %c0_16] : memref<4x64xf32, #tpu.memory_space<vmem>>, vector<4x64xf32>
    %cst_17 = arith.constant dense<0.000000e+00> : vector<4x64xf32>
    %16 = tpu.matmul %14, %15, %cst_17 {dimension_numbers = #tpu.dot_dimension_numbers<[1], [0], [0], [1], [0, 0, 1, 1], [], []>} : vector<4x4xf32>, vector<4x64xf32>, vector<4x64xf32> -> vector<4x64xf32>
    %c0_18 = arith.constant 0 : index
    %c0_19 = arith.constant 0 : index
    %17 = vector.load %arg4[%c0_18, %c0_19] : memref<1x64xf32, #tpu.memory_space<vmem>>, vector<1x64xf32>
    %18 = vector.broadcast %17 : vector<1x64xf32> to vector<4x64xf32>
    %19 = arith.addf %16, %18 : vector<4x64xf32>
    %20 = vector.extract_strided_slice %19 {offsets = [0, 0], sizes = [2, 64], strides = [1, 1]} : vector<4x64xf32> to vector<2x64xf32>
    %21 = vector.extract_strided_slice %19 {offsets = [2, 0], sizes = [2, 64], strides = [1, 1]} : vector<4x64xf32> to vector<2x64xf32>
    %22 = arith.addf %20, %21 : vector<2x64xf32>
    %23 = arith.negf %22 : vector<2x64xf32>
    %24 = math.exp %23 : vector<2x64xf32>
    %cst_20 = arith.constant 1.000000e+00 : f32
    %25 = vector.broadcast %cst_20 : f32 to vector<2x64xf32>
    %26 = arith.addf %25, %24 : vector<2x64xf32>
    %27 = arith.divf %25, %26 : vector<2x64xf32>
    %c0_21 = arith.constant 0 : index
    %c0_22 = arith.constant 0 : index
    %28 = vector.load %arg5[%c0_21, %c0_22] : memref<2x64xf32, #tpu.memory_space<vmem>>, vector<2x64xf32>
    tpu.vector_store %arg5[%c0_21, %c0_22], %27 {strides = array<i32>} : memref<2x64xf32, #tpu.memory_space<vmem>>, vector<2x64xf32>,
    return
  }
}

</mosaic_0001>

<llo_original>
// kernel: channel_gate.1
$region0: #{channel_gate.1}
  #allocation0 [shape = 'u32[]', space=smem, size = 0x4, offset = 0x4, fixed_abs, tag = 'smem constant byte address 0x4 - core index']
  #allocation1 [shape = 'u32[144,128]{1,0:T(1,128)}', space=vmem, size = 0x12000, scoped, tag = 'internal scratch']
  #allocation2 [shape = 'f32[4,64]{1,0:T(4,128)}', space=vmem, size = 0x800, scoped, tag = 'scratch operand']
  %s0 = inlined_call_operand.vmem [shape: f32[2,64,256], index: 0, kind: input, shape index: {}]
  %s1 = inlined_call_operand.vmem [shape: f32[64,4], index: 1, kind: input, shape index: {}]
  %s2 = inlined_call_operand.vmem [shape: f32[1,4], index: 2, kind: input, shape index: {}]
  %s3 = inlined_call_operand.vmem [shape: f32[4,64], index: 3, kind: input, shape index: {}]
  %s4 = inlined_call_operand.vmem [shape: f32[1,64], index: 4, kind: input, shape index: {}]
  %s5 = inlined_call_operand.vmem [shape: f32[2,64], index: 5, kind: output, shape index: {}]
  %s6 = sld [smem:[#allocation0]]
  $region30: #{channel_gate.1} parent=0
    _
  %s8 = ssub.s32 1, %s6
  %s9 = scalar_select 0, %s8, %s6
  // Predicated region
  $region2: #{channel_gate.1} parent=0 // pred_check
    _
  $region3: #{channel_gate.1} parent=0 // pred_check_branch
    %11 = sbr.rel (0) target = $region5
  $region4: #{channel_gate.1} parent=0 // pred_region
    _
  $region5: #{channel_gate.1} parent=0 // pred_fallthru
    _
  // Predicated region
  $region6: #{channel_gate.1} parent=0 // pred_check
    _
  $region7: #{channel_gate.1} parent=0 // pred_check_branch
    %13 = sbr.rel (0) target = $region9
  $region8: #{channel_gate.1} parent=0 // pred_region
    _
  $region9: #{channel_gate.1} parent=0 // pred_fallthru
    _
  // Predicated region
  $region10: #{channel_gate.1} parent=0 // pred_check
    _
  $region11: #{channel_gate.1} parent=0 // pred_check_branch
    %15 = sbr.rel (0) target = $region13
  $region12: #{channel_gate.1} parent=0 // pred_region
    _
  $region13: #{channel_gate.1} parent=0 // pred_fallthru
    _
  // Predicated region
  $region14: #{channel_gate.1} parent=0 // pred_check
    _
  $region15: #{channel_gate.1} parent=0 // pred_check_branch
    %17 = sbr.rel (0) target = $region17
  $region16: #{channel_gate.1} parent=0 // pred_region
    _
  $region17: #{channel_gate.1} parent=0 // pred_fallthru
    _
  // Predicated region
  $region18: #{channel_gate.1} parent=0 // pred_check
    _
  $region19: #{channel_gate.1} parent=0 // pred_check_branch
    %19 = sbr.rel (0) target = $region21
  $region20: #{channel_gate.1} parent=0 // pred_region
    _
  $region21: #{channel_gate.1} parent=0 // pred_fallthru
    _
  %v20 = vld [vmem:[%s0] sm:$0xff]
  %v21 = vld [vmem:[%s0 + $0x8] sm:$0xff]
  %v22 = vld [vmem:[%s0 + $0x10] sm:$0xff]
  %v23 = vld [vmem:[%s0 + $0x18] sm:$0xff]
  %v24 = vld [vmem:[%s0 + $0x20] sm:$0xff]
  %v25 = vld [vmem:[%s0 + $0x28] sm:$0xff]
  %v26 = vld [vmem:[%s0 + $0x30] sm:$0xff]
  %v27 = vld [vmem:[%s0 + $0x38] sm:$0xff]
  %v28 = vld [vmem:[%s0 + $0x40] sm:$0xff]
  %v29 = vld [vmem:[%s0 + $0x48] sm:$0xff]
  %v30 = vld [vmem:[%s0 + $0x50] sm:$0xff]
  %v31 = vld [vmem:[%s0 + $0x58] sm:$0xff]
  %v32 = vld [vmem:[%s0 + $0x60] sm:$0xff]
  %v33 = vld [vmem:[%s0 + $0x68] sm:$0xff]
  %v34 = vld [vmem:[%s0 + $0x70] sm:$0xff]
  %v35 = vld [vmem:[%s0 + $0x78] sm:$0xff]
  %v36 = vld [vmem:[%s0 + $0x80] sm:$0xff]
  %v37 = vld [vmem:[%s0 + $0x88] sm:$0xff]
  %v38 = vld [vmem:[%s0 + $0x90] sm:$0xff]
  %v39 = vld [vmem:[%s0 + $0x98] sm:$0xff]
  %v40 = vld [vmem:[%s0 + $0xa0] sm:$0xff]
  %v41 = vld [vmem:[%s0 + $0xa8] sm:$0xff]
  %v42 = vld [vmem:[%s0 + $0xb0] sm:$0xff]
  %v43 = vld [vmem:[%s0 + $0xb8] sm:$0xff]
  %v44 = vld [vmem:[%s0 + $0xc0] sm:$0xff]
  %v45 = vld [vmem:[%s0 + $0xc8] sm:$0xff]
  %v46 = vld [vmem:[%s0 + $0xd0] sm:$0xff]
  %v47 = vld [vmem:[%s0 + $0xd8] sm:$0xff]
  %v48 = vld [vmem:[%s0 + $0xe0] sm:$0xff]
  %v49 = vld [vmem:[%s0 + $0xe8] sm:$0xff]
  %v50 = vld [vmem:[%s0 + $0xf0] sm:$0xff]
  %v51 = vld [vmem:[%s0 + $0xf8] sm:$0xff]
  %v52 = vadd.f32 %v20, %v21
  %53 = vadd.xlane.f32.xlu0 %v52
  %v54 = vpop.xlane.xlu0 %53
  %v55 = vadd.f32 %v22, %v23
  %56 = vadd.xlane.f32.xlu0 %v55
  %v57 = vpop.xlane.xlu0 %56
  %v58 = vadd.f32 %v24, %v25
  %59 = vadd.xlane.f32.xlu0 %v58
  %v60 = vpop.xlane.xlu0 %59
  %v61 = vadd.f32 %v26, %v27
  %62 = vadd.xlane.f32.xlu0 %v61
  %v63 = vpop.xlane.xlu0 %62
  %v64 = vadd.f32 %v28, %v29
  %65 = vadd.xlane.f32.xlu0 %v64
  %v66 = vpop.xlane.xlu0 %65
  %v67 = vadd.f32 %v30, %v31
  %68 = vadd.xlane.f32.xlu0 %v67
  %v69 = vpop.xlane.xlu0 %68
  %v70 = vadd.f32 %v32, %v33
  %71 = vadd.xlane.f32.xlu0 %v70
  %v72 = vpop.xlane.xlu0 %71
  %v73 = vadd.f32 %v34, %v35
  %74 = vadd.xlane.f32.xlu0 %v73
  %v75 = vpop.xlane.xlu0 %74
  %v76 = vadd.f32 %v36, %v37
  %77 = vadd.xlane.f32.xlu0 %v76
  %v78 = vpop.xlane.xlu0 %77
  %v79 = vadd.f32 %v38, %v39
  %80 = vadd.xlane.f32.xlu0 %v79
  %v81 = vpop.xlane.xlu0 %80
  %v82 = vadd.f32 %v40, %v41
  %83 = vadd.xlane.f32.xlu0 %v82
  %v84 = vpop.xlane.xlu0 %83
  %v85 = vadd.f32 %v42, %v43
  %86 = vadd.xlane.f32.xlu0 %v85
  %v87 = vpop.xlane.xlu0 %86
  %v88 = vadd.f32 %v44, %v45
  %89 = vadd.xlane.f32.xlu0 %v88
  %v90 = vpop.xlane.xlu0 %89
  %v91 = vadd.f32 %v46, %v47
  %92 = vadd.xlane.f32.xlu0 %v91
  %v93 = vpop.xlane.xlu0 %92
  %v94 = vadd.f32 %v48, %v49
  %95 = vadd.xlane.f32.xlu0 %v94
  %v96 = vpop.xlane.xlu0 %95
  %v97 = vadd.f32 %v50, %v51
  %98 = vadd.xlane.f32.xlu0 %v97
  %v99 = vpop.xlane.xlu0 %98
  %v100 = vmul.f32 %v54, 0.00390625
  %v101 = vmul.f32 %v57, 0.00390625
  %v102 = vmul.f32 %v60, 0.00390625
  %v103 = vmul.f32 %v63, 0.00390625
  %v104 = vmul.f32 %v66, 0.00390625
  %v105 = vmul.f32 %v69, 0.00390625
  %v106 = vmul.f32 %v72, 0.00390625
  %v107 = vmul.f32 %v75, 0.00390625
  %v108 = vmul.f32 %v78, 0.00390625
  %v109 = vmul.f32 %v81, 0.00390625
  %v110 = vmul.f32 %v84, 0.00390625
  %v111 = vmul.f32 %v87, 0.00390625
  %v112 = vmul.f32 %v90, 0.00390625
  %v113 = vmul.f32 %v93, 0.00390625
  %v114 = vmul.f32 %v96, 0.00390625
  %v115 = vmul.f32 %v99, 0.00390625
  %v132 = vlaneseq
  %v133 = vand.u32 %v132, 127
  %v134 = vlaneseq
  %v135 = vshrl.u32 %v134, 7
  %v136 = vsub.s32 %v133, %v135
  %v137 = vrot.slane %v100, %v136
  %v138 = vadd.s32 %v133, 4294967288
  %v139 = vlaneseq
  %v140 = vshrl.u32 %v139, 7
  %v141 = vsub.s32 %v138, %v140
  %v142 = vrot.slane %v101, %v141
  %vm143 = vcmask 130112
  %v144 = vsel %vm143, %v142, %v137
  %v145 = vadd.s32 %v133, 4294967280
  %v146 = vlaneseq
  %v147 = vshrl.u32 %v146, 7
  %v148 = vsub.s32 %v145, %v147
  %v149 = vrot.slane %v102, %v148
  %vm150 = vcmask 195712
  %v151 = vsel %vm150, %v149, %v144
  %v152 = vadd.s32 %v133, 4294967272
  %v153 = vlaneseq
  %v154 = vshrl.u32 %v153, 7
  %v155 = vsub.s32 %v152, %v154
  %v156 = vrot.slane %v103, %v155
  %vm157 = vcmask 261312
  %v158 = vsel %vm157, %v156, %v151
  %v159 = vadd.s32 %v133, 4294967264
  %v160 = vlaneseq
  %v161 = vshrl.u32 %v160, 7
  %v162 = vsub.s32 %v159, %v161
  %v163 = vrot.slane %v104, %v162
  %vm164 = vcmask 326912
  %v165 = vsel %vm164, %v163, %v158
  %v166 = vadd.s32 %v133, 4294967256
  %v167 = vlaneseq
  %v168 = vshrl.u32 %v167, 7
  %v169 = vsub.s32 %v166, %v168
  %v170 = vrot.slane %v105, %v169
  %vm171 = vcmask 392512
  %v172 = vsel %vm171, %v170, %v165
  %v173 = vadd.s32 %v133, 4294967248
  %v174 = vlaneseq
  %v175 = vshrl.u32 %v174, 7
  %v176 = vsub.s32 %v173, %v175
  %v177 = vrot.slane %v106, %v176
  %vm178 = vcmask 458112
  %v179 = vsel %vm178, %v177, %v172
  %v180 = vadd.s32 %v133, 4294967240
  %v181 = vlaneseq
  %v182 = vshrl.u32 %v181, 7
  %v183 = vsub.s32 %v180, %v182
  %v184 = vrot.slane %v107, %v183
  %vm185 = vcmask 523712
  %v186 = vsel %vm185, %v184, %v179
  %v187 = vlaneseq
  %v188 = vshrl.u32 %v187, 7
  %v189 = vsub.s32 %v133, %v188
  %v190 = vrot.slane %v108, %v189
  %v191 = vlaneseq
  %v192 = vshrl.u32 %v191, 7
  %v193 = vsub.s32 %v138, %v192
  %v194 = vrot.slane %v109, %v193
  %v195 = vsel %vm143, %v194, %v190
  %v196 = vlaneseq
  %v197 = vshrl.u32 %v196, 7
  %v198 = vsub.s32 %v145, %v197
  %v199 = vrot.slane %v110, %v198
  %v200 = vsel %vm150, %v199, %v195
  %v201 = vlaneseq
  %v202 = vshrl.u32 %v201, 7
  %v203 = vsub.s32 %v152, %v202
  %v204 = vrot.slane %v111, %v203
  %v205 = vsel %vm157, %v204, %v200
  %v206 = vlaneseq
  %v207 = vshrl.u32 %v206, 7
  %v208 = vsub.s32 %v159, %v207
  %v209 = vrot.slane %v112, %v208
  %v210 = vsel %vm164, %v209, %v205
  %v211 = vlaneseq
  %v212 = vshrl.u32 %v211, 7
  %v213 = vsub.s32 %v166, %v212
  %v214 = vrot.slane %v113, %v213
  %v215 = vsel %vm171, %v214, %v210
  %v216 = vlaneseq
  %v217 = vshrl.u32 %v216, 7
  %v218 = vsub.s32 %v173, %v217
  %v219 = vrot.slane %v114, %v218
  %v220 = vsel %vm178, %v219, %v215
  %v221 = vlaneseq
  %v222 = vshrl.u32 %v221, 7
  %v223 = vsub.s32 %v180, %v222
  %v224 = vrot.slane %v115, %v223
  %v225 = vsel %vm185, %v224, %v220
  %vm226 = vcmask 1041409
  %v227 = vsel %vm226, %v225, %v186
  %vm229 = vcmask 517120
  %230 = vst.msk [vmem:[#allocation2] sm:$0x3] %vm229, %v227
  %v231 = vmax.f32 %v20, %v21
  %232 = vmax.xlane.f32.xlu0 %v231
  %v233 = vpop.xlane.xlu0 %232
  %v234 = vmax.f32 %v22, %v23
  %235 = vmax.xlane.f32.xlu0 %v234
  %v236 = vpop.xlane.xlu0 %235
  %v237 = vmax.f32 %v24, %v25
  %238 = vmax.xlane.f32.xlu0 %v237
  %v239 = vpop.xlane.xlu0 %238
  %v240 = vmax.f32 %v26, %v27
  %241 = vmax.xlane.f32.xlu0 %v240
  %v242 = vpop.xlane.xlu0 %241
  %v243 = vmax.f32 %v28, %v29
  %244 = vmax.xlane.f32.xlu0 %v243
  %v245 = vpop.xlane.xlu0 %244
  %v246 = vmax.f32 %v30, %v31
  %247 = vmax.xlane.f32.xlu0 %v246
  %v248 = vpop.xlane.xlu0 %247
  %v249 = vmax.f32 %v32, %v33
  %250 = vmax.xlane.f32.xlu0 %v249
  %v251 = vpop.xlane.xlu0 %250
  %v252 = vmax.f32 %v34, %v35
  %253 = vmax.xlane.f32.xlu0 %v252
  %v254 = vpop.xlane.xlu0 %253
  %v255 = vmax.f32 %v36, %v37
  %256 = vmax.xlane.f32.xlu0 %v255
  %v257 = vpop.xlane.xlu0 %256
  %v258 = vmax.f32 %v38, %v39
  %259 = vmax.xlane.f32.xlu0 %v258
  %v260 = vpop.xlane.xlu0 %259
  %v261 = vmax.f32 %v40, %v41
  %262 = vmax.xlane.f32.xlu0 %v261
  %v263 = vpop.xlane.xlu0 %262
  %v264 = vmax.f32 %v42, %v43
  %265 = vmax.xlane.f32.xlu0 %v264
  %v266 = vpop.xlane.xlu0 %265
  %v267 = vmax.f32 %v44, %v45
  %268 = vmax.xlane.f32.xlu0 %v267
  %v269 = vpop.xlane.xlu0 %268
  %v270 = vmax.f32 %v46, %v47
  %271 = vmax.xlane.f32.xlu0 %v270
  %v272 = vpop.xlane.xlu0 %271
  %v273 = vmax.f32 %v48, %v49
  %274 = vmax.xlane.f32.xlu0 %v273
  %v275 = vpop.xlane.xlu0 %274
  %v276 = vmax.f32 %v50, %v51
  %277 = vmax.xlane.f32.xlu0 %v276
  %v278 = vpop.xlane.xlu0 %277
  %v295 = vlaneseq
  %v296 = vshrl.u32 %v295, 7
  %v297 = vsub.s32 %v133, %v296
  %v298 = vrot.slane %v233, %v297
  %v299 = vlaneseq
  %v300 = vshrl.u32 %v299, 7
  %v301 = vsub.s32 %v138, %v300
  %v302 = vrot.slane %v236, %v301
  %v303 = vsel %vm143, %v302, %v298
  %v304 = vlaneseq
  %v305 = vshrl.u32 %v304, 7
  %v306 = vsub.s32 %v145, %v305
  %v307 = vrot.slane %v239, %v306
  %v308 = vsel %vm150, %v307, %v303
  %v309 = vlaneseq
  %v310 = vshrl.u32 %v309, 7
  %v311 = vsub.s32 %v152, %v310
  %v312 = vrot.slane %v242, %v311
  %v313 = vsel %vm157, %v312, %v308
  %v314 = vlaneseq
  %v315 = vshrl.u32 %v314, 7
  %v316 = vsub.s32 %v159, %v315
  %v317 = vrot.slane %v245, %v316
  %v318 = vsel %vm164, %v317, %v313
  %v319 = vlaneseq
  %v320 = vshrl.u32 %v319, 7
  %v321 = vsub.s32 %v166, %v320
  %v322 = vrot.slane %v248, %v321
  %v323 = vsel %vm171, %v322, %v318
  %v324 = vlaneseq
  %v325 = vshrl.u32 %v324, 7
  %v326 = vsub.s32 %v173, %v325
  %v327 = vrot.slane %v251, %v326
  %v328 = vsel %vm178, %v327, %v323
  %v329 = vlaneseq
  %v330 = vshrl.u32 %v329, 7
  %v331 = vsub.s32 %v180, %v330
  %v332 = vrot.slane %v254, %v331
  %v333 = vsel %vm185, %v332, %v328
  %v334 = vlaneseq
  %v335 = vshrl.u32 %v334, 7
  %v336 = vsub.s32 %v133, %v335
  %v337 = vrot.slane %v257, %v336
  %v338 = vlaneseq
  %v339 = vshrl.u32 %v338, 7
  %v340 = vsub.s32 %v138, %v339
  %v341 = vrot.slane %v260, %v340
  %v342 = vsel %vm143, %v341, %v337
  %v343 = vlaneseq
  %v344 = vshrl.u32 %v343, 7
  %v345 = vsub.s32 %v145, %v344
  %v346 = vrot.slane %v263, %v345
  %v347 = vsel %vm150, %v346, %v342
  %v348 = vlaneseq
  %v349 = vshrl.u32 %v348, 7
  %v350 = vsub.s32 %v152, %v349
  %v351 = vrot.slane %v266, %v350
  %v352 = vsel %vm157, %v351, %v347
  %v353 = vlaneseq
  %v354 = vshrl.u32 %v353, 7
  %v355 = vsub.s32 %v159, %v354
  %v356 = vrot.slane %v269, %v355
  %v357 = vsel %vm164, %v356, %v352
  %v358 = vlaneseq
  %v359 = vshrl.u32 %v358, 7
  %v360 = vsub.s32 %v166, %v359
  %v361 = vrot.slane %v272, %v360
  %v362 = vsel %vm171, %v361, %v357
  %v363 = vlaneseq
  %v364 = vshrl.u32 %v363, 7
  %v365 = vsub.s32 %v173, %v364
  %v366 = vrot.slane %v275, %v365
  %v367 = vsel %vm178, %v366, %v362
  %v368 = vlaneseq
  %v369 = vshrl.u32 %v368, 7
  %v370 = vsub.s32 %v180, %v369
  %v371 = vrot.slane %v278, %v370
  %v372 = vsel %vm185, %v371, %v367
  %v373 = vsel %vm226, %v372, %v333
  %375 = vst.msk [vmem:[#allocation2 + $0x2] sm:$0x3] %vm229, %v373
  %v376 = vld [vmem:[#allocation2] sm:$0xf]
  %v377 = vld [vmem:[%s1] sm:$0xff]
  %v378 = vld [vmem:[%s1 + $0x8] sm:$0xff]
  %v379 = vld [vmem:[%s1 + $0x10] sm:$0xff]
  %v380 = vld [vmem:[%s1 + $0x18] sm:$0xff]
  %v381 = vld [vmem:[%s1 + $0x20] sm:$0xff]
  %v382 = vld [vmem:[%s1 + $0x28] sm:$0xff]
  %v383 = vld [vmem:[%s1 + $0x30] sm:$0xff]
  %v384 = vld [vmem:[%s1 + $0x38] sm:$0xff]
  %v385 = vld [vmem:[%s2] sm:$0x1]
  %v387 = vlaneseq
  %v388 = vshrl.u32 %v387, 7
  %v389 = vsub.s32 0, %v388
  %v390 = vrot.slane %v385, %v389
  %vm392 = vcmask 523264
  %v394 = vsel %vm392, %v376, 0
  %396 = vmatprep.subr.mxu0 0.0
  %397 = vmatpush1.msra.mxu0 %v377
  %398 = vmatprep.subr.mxu0 0.0
  %399 = vmatpush1.msra.mxu0 %v378
  %400 = vmatprep.subr.mxu0 0.0
  %401 = vmatpush1.msra.mxu0 %v379
  %402 = vmatprep.subr.mxu0 0.0
  %403 = vmatpush1.msra.mxu0 %v380
  %404 = vmatprep.subr.mxu0 0.0
  %405 = vmatpush1.msra.mxu0 %v381
  %406 = vmatprep.subr.mxu0 0.0
  %407 = vmatpush1.msra.mxu0 %v382
  %408 = vmatprep.subr.mxu0 0.0
  %409 = vmatpush1.msra.mxu0 %v383
  %410 = vmatprep.subr.mxu0 0.0
  %411 = vmatpush1.msra.mxu0 %v384
  %412 = vmatprep.subr.mxu0 0.0
  %413 = vmatpush1.msra.mxu0 0.0
  %414 = vmatprep.subr.mxu0 0.0
  %415 = vmatpush1.msra.mxu0 0.0
  %416 = vmatprep.subr.mxu0 0.0
  %417 = vmatpush1.msra.mxu0 0.0
  %418 = vmatprep.subr.mxu0 0.0
  %419 = vmatpush1.msra.mxu0 0.0
  %420 = vmatprep.subr.mxu0 0.0
  %421 = vmatpush1.msra.mxu0 0.0
  %422 = vmatprep.subr.mxu0 0.0
  %423 = vmatpush1.msra.mxu0 0.0
  %424 = vmatprep.subr.mxu0 0.0
  %425 = vmatpush1.msra.mxu0 0.0
  %426 = vmatprep.subr.mxu0 0.0
  %427 = vmatpush1.msra.mxu0 0.0
  %428 = vmatprep.subr.mxu0 0.0
  %429 = vmatpush1.msra.mxu0 0.0
  %430 = vmatprep.subr.mxu0 0.0
  %431 = vmatpush1.msra.mxu0 0.0
  %432 = vmatprep.subr.mxu0 0.0
  %433 = vmatpush1.msra.mxu0 0.0
  %434 = vmatprep.subr.mxu0 0.0
  %435 = vmatpush1.msra.mxu0 0.0
  %436 = vmatprep.subr.mxu0 0.0
  %437 = vmatpush1.msra.mxu0 0.0
  %438 = vmatprep.subr.mxu0 0.0
  %439 = vmatpush1.msra.mxu0 0.0
  %440 = vmatprep.subr.mxu0 0.0
  %441 = vmatpush1.msra.mxu0 0.0
  %442 = vmatprep.subr.mxu0 0.0
  %443 = vmatpush1.msra.mxu0 0.0
  %444 = vmatprep.subr.mxu0 0.0
  %445 = vmatpush1.msra.mxu0 0.0
  %446 = vmatprep.subr.mxu0 0.0
  %447 = vmatpush1.msra.mxu0 0.0
  %448 = vmatprep.subr.mxu0 0.0
  %449 = vmatpush1.msra.mxu0 0.0
  %450 = vmatprep.subr.mxu0 0.0
  %451 = vmatpush1.msra.mxu0 0.0
  %452 = vmatprep.subr.mxu0 0.0
  %453 = vmatpush1.msra.mxu0 0.0
  %454 = vmatprep.subr.mxu0 0.0
  %455 = vmatpush1.msra.mxu0 0.0
  %456 = vmatprep.subr.mxu0 0.0
  %457 = vmatpush1.msra.mxu0 0.0
  %458 = vmatprep.subr.mxu0 0.0
  %459 = vmatpush1.msra.mxu0 0.0
  %460 = vmatprep.mubr.f32.mxu0 0.0
  %461 = vmatmul.mubr.f32.gmra.mrb[0].mxu0 %v394
  %v462 = vpop.f32.mrb[0].mxu0
  %v463 = vadd.f32 %v390, %v462
  %v464 = vpop.f32.mrb[0].mxu0
  %465 = vdwg.mxu0
  %v466 = vmax.f32 %v463, 0.0
  %v467 = vld [vmem:[%s3] sm:$0xf]
  %v468 = vld [vmem:[%s4] sm:$0x1]
  %v470 = vlaneseq
  %v471 = vshrl.u32 %v470, 7
  %v472 = vsub.s32 0, %v471
  %v473 = vrot.slane %v468, %v472
  %vm475 = vcmask 31744
  %v477 = vsel %vm475, %v466, 0
  %vm479 = vcmask 1043456
  %v481 = vsel %vm479, %v467, 0
  %483 = vmatprep.subr.mxu0 0.0
  %484 = vmatpush1.msra.mxu0 %v481
  %485 = vmatprep.subr.mxu0 0.0
  %486 = vmatpush1.msra.mxu0 0.0
  %487 = vmatprep.subr.mxu0 0.0
  %488 = vmatpush1.msra.mxu0 0.0
  %489 = vmatprep.subr.mxu0 0.0
  %490 = vmatpush1.msra.mxu0 0.0
  %491 = vmatprep.subr.mxu0 0.0
  %492 = vmatpush1.msra.mxu0 0.0
  %493 = vmatprep.subr.mxu0 0.0
  %494 = vmatpush1.msra.mxu0 0.0
  %495 = vmatprep.subr.mxu0 0.0
  %496 = vmatpush1.msra.mxu0 0.0
  %497 = vmatprep.subr.mxu0 0.0
  %498 = vmatpush1.msra.mxu0 0.0
  %499 = vmatprep.subr.mxu0 0.0
  %500 = vmatpush1.msra.mxu0 0.0
  %501 = vmatprep.subr.mxu0 0.0
  %502 = vmatpush1.msra.mxu0 0.0
  %503 = vmatprep.subr.mxu0 0.0
  %504 = vmatpush1.msra.mxu0 0.0
  %505 = vmatprep.subr.mxu0 0.0
  %506 = vmatpush1.msra.mxu0 0.0
  %507 = vmatprep.subr.mxu0 0.0
  %508 = vmatpush1.msra.mxu0 0.0
  %509 = vmatprep.subr.mxu0 0.0
  %510 = vmatpush1.msra.mxu0 0.0
  %511 = vmatprep.subr.mxu0 0.0
  %512 = vmatpush1.msra.mxu0 0.0
  %513 = vmatprep.subr.mxu0 0.0
  %514 = vmatpush1.msra.mxu0 0.0
  %515 = vmatprep.subr.mxu0 0.0
  %516 = vmatpush1.msra.mxu0 0.0
  %517 = vmatprep.subr.mxu0 0.0
  %518 = vmatpush1.msra.mxu0 0.0
  %519 = vmatprep.subr.mxu0 0.0
  %520 = vmatpush1.msra.mxu0 0.0
  %521 = vmatprep.subr.mxu0 0.0
  %522 = vmatpush1.msra.mxu0 0.0
  %523 = vmatprep.subr.mxu0 0.0
  %524 = vmatpush1.msra.mxu0 0.0
  %525 = vmatprep.subr.mxu0 0.0
  %526 = vmatpush1.msra.mxu0 0.0
  %527 = vmatprep.subr.mxu0 0.0
  %528 = vmatpush1.msra.mxu0 0.0
  %529 = vmatprep.subr.mxu0 0.0
  %530 = vmatpush1.msra.mxu0 0.0
  %531 = vmatprep.subr.mxu0 0.0
  %532 = vmatpush1.msra.mxu0 0.0
  %533 = vmatprep.subr.mxu0 0.0
  %534 = vmatpush1.msra.mxu0 0.0
  %535 = vmatprep.subr.mxu0 0.0
  %536 = vmatpush1.msra.mxu0 0.0
  %537 = vmatprep.subr.mxu0 0.0
  %538 = vmatpush1.msra.mxu0 0.0
  %539 = vmatprep.subr.mxu0 0.0
  %540 = vmatpush1.msra.mxu0 0.0
  %541 = vmatprep.subr.mxu0 0.0
  %542 = vmatpush1.msra.mxu0 0.0
  %543 = vmatprep.subr.mxu0 0.0
  %544 = vmatpush1.msra.mxu0 0.0
  %545 = vmatprep.subr.mxu0 0.0
  %546 = vmatpush1.msra.mxu0 0.0
  %547 = vmatprep.mubr.f32.mxu0 0.0
  %548 = vmatmul.mubr.f32.gmra.mrb[0].mxu0 %v477
  %v549 = vpop.f32.mrb[0].mxu0
  %v550 = vadd.f32 %v473, %v549
  %v551 = vpop.f32.mrb[0].mxu0
  %552 = vdwg.mxu0
  %v554 = vrot.slane %v550, 2
  %v556 = vadd.f32 %v550, %v554
  %v557 = vxor.u32 %v556, 2147483648
  %v558 = vmul.f32 %v557, 1.442695
  %v559 = vpow.pop %v558
  %v560 = vadd.f32 %v559, 1.0
  %v561 = vrcp.pop %v560
  %v562 = vmul.f32 1.0, %v561
  %563 = vst.msk [vmem:[%s5] sm:$0x3] %vm229, %v562
  // Predicated region
  $region22: #{channel_gate.1} parent=0 // pred_check
    _
  $region23: #{channel_gate.1} parent=0 // pred_check_branch
    %565 = sbr.rel (0) target = $region25
  $region24: #{channel_gate.1} parent=0 // pred_region
    _
  $region25: #{channel_gate.1} parent=0 // pred_fallthru
    _
  // Predicated region
  $region26: #{channel_gate.1} parent=0 // pred_check
    _
  $region27: #{channel_gate.1} parent=0 // pred_check_branch
    %567 = sbr.rel (0) target = $region29
  $region28: #{channel_gate.1} parent=0 // pred_region
    _
  $region29: #{channel_gate.1} parent=0 // pred_fallthru
    _

</llo_original>
